<compile_context>
chip_gen: v7x
topology: tpu7x:2x2x1
jax: 0.10.0
libtpu: 0.0.40
codegen_flags: <defaults>
</compile_context>

<pallas_src>
import jax
import jax.numpy as jnp
from jax.experimental import pallas as pl
from jax.experimental.pallas import tpu as pltpu


def _clamp_kernel(bounds_ref, x_ref, o_ref):
    # bounds_ref is a (2,) float32 array in SMEM: [vmin, vmax].
    x = x_ref[...]
    vmin = bounds_ref[0].astype(x.dtype)
    vmax = bounds_ref[1].astype(x.dtype)
    # min-after-max ordering matches torch.clamp semantics
    # (vmin > vmax yields vmax; NaNs propagate).
    o_ref[...] = jnp.minimum(jnp.maximum(x, vmin), vmax)


def _sublane_granularity(dtype):
    itemsize = jnp.dtype(dtype).itemsize
    if itemsize >= 4:
        return 8
    if itemsize == 2:
        return 16
    return 32


def clamp_pallas(x, vmin, vmax, *, target_block_bytes=4 * 1024 * 1024):
    """Elementwise clamp(x, vmin, vmax) via a Pallas TPU kernel."""
    orig_shape = x.shape
    dtype = x.dtype
    n = x.size
    if n == 0:
        return x

    # TODO(synk): for integer inputs with float bounds, torch.clamp promotes
    # differently; here bounds are cast to x.dtype (exact for float inputs).
    if n % 128 != 0:
        # Non-lane-aligned sizes would require a pad + output slice (each a
        # full extra HBM pass for a purely bandwidth-bound op).  XLA's fused
        # clip already runs at roofline, so use it for this minority case.
        return jnp.clip(x, jnp.asarray(vmin, dtype), jnp.asarray(vmax, dtype))

    itemsize = jnp.dtype(dtype).itemsize

    # --- pick the widest lane dimension (multiple of 128) dividing n exactly,
    #     so no padding and no output slice is ever needed on this path. ------
    lane_width = 128
    for c in (2048, 1024, 512, 256, 128):
        if n % c == 0:
            lane_width = c
            break

    rows = n // lane_width
    x2d = jnp.ravel(x).reshape(rows, lane_width)

    # --- row tile: ~target_block_bytes per block, rounded to the dtype's
    #     sublane packing granularity. ---------------------------------------
    g = _sublane_granularity(dtype)
    tile_rows = max(g, (target_block_bytes // (lane_width * itemsize)) // g * g)

    if rows <= tile_rows:
        # Single block == full array: (8,128) divisibility is waived.
        tile_rows = rows
        grid = (1,)
    else:
        # Non-dividing final block is fine: Pallas clips the boundary DMA and
        # masks OOB writes; OOB reads are garbage but never written back
        # (safe for clamp -- do not copy this pattern into reductions).
        grid = (pl.cdiv(rows, tile_rows),)

    bounds = jnp.asarray([vmin, vmax], dtype=jnp.float32)

    out2d = pl.pallas_call(
        _clamp_kernel,
        out_shape=jax.ShapeDtypeStruct((rows, lane_width), dtype),
        grid_spec=pltpu.PrefetchScalarGridSpec(
            num_scalar_prefetch=0,
            grid=grid,
            in_specs=[
                pl.BlockSpec(memory_space=pltpu.MemorySpace.SMEM),  # bounds
                pl.BlockSpec((tile_rows, lane_width), lambda i: (i, 0)),
            ],
            out_specs=pl.BlockSpec((tile_rows, lane_width), lambda i: (i, 0)),
        ),
        compiler_params=pltpu.CompilerParams(
            # TODO(synk): on v7x verify both TensorCores engage; if a trace
            # shows one TC, switch this axis to pltpu.CORE_PARALLEL.
            dimension_semantics=("parallel",),
            vmem_limit_bytes=48 * 1024 * 1024,
        ),
    )(bounds, x2d)

    return out2d.reshape(orig_shape)


class ClampOperator:
    """JAX/Pallas equivalent of the PyTorch ClampOperator module."""

    def __init__(self, vmin, vmax):
        self.vmin = vmin
        self.vmax = vmax

    def __call__(self, x):
        return clamp_pallas(x, self.vmin, self.vmax)


if __name__ == "__main__":
    key = jax.random.PRNGKey(0)
    # Small NCHW-shaped input consistent with typical module usage.
    x = jax.random.normal(key, (2, 4, 16, 16), dtype=jnp.float32) * 3.0

    vmin, vmax = -1.0, 1.0
    op = ClampOperator(vmin, vmax)

    out = jax.block_until_ready(op(x))

    # Verify against plain JAX reference.
    ref = jnp.clip(x, vmin, vmax)
    assert out.shape == x.shape and out.dtype == x.dtype
    assert jnp.allclose(out, ref), "mismatch vs reference clamp"

    print("KERNEL_OK")
</pallas_src>

<mosaic_0001>
module attributes {stable_mosaic.version = 11 : i64} {
  func.func @_clamp_kernel(%arg0: i32, %arg1: memref<2xf32, #tpu.memory_space<smem>>, %arg2: memref<1x2048xf32, #tpu.memory_space<vmem>>, %arg3: memref<1x2048xf32, #tpu.memory_space<vmem>>) attributes {dimension_semantics = [#tpu.dimension_semantics<parallel>], iteration_bounds = array<i64: 1>, scalar_prefetch = 0 : i64, scratch_operands = 0 : i64, tpu.core_type = #tpu.core_type<tc>, window_params = [{transform_indices = @transform_0, window_bounds = array<i64: 2>}, {transform_indices = @transform_1, window_bounds = array<i64: 1, 2048>}, {transform_indices = @transform_2, window_bounds = array<i64: 1, 2048>}]} {
    %c0 = arith.constant 0 : index
    %c0_0 = arith.constant 0 : index
    %0 = vector.load %arg2[%c0, %c0_0] : memref<1x2048xf32, #tpu.memory_space<vmem>>, vector<1x2048xf32>
    %c0_1 = arith.constant 0 : index
    %1 = memref.load %arg1[%c0_1] : memref<2xf32, #tpu.memory_space<smem>>
    %c1 = arith.constant 1 : index
    %2 = memref.load %arg1[%c1] : memref<2xf32, #tpu.memory_space<smem>>
    %3 = vector.broadcast %1 : f32 to vector<1x2048xf32>
    %4 = arith.maximumf %0, %3 : vector<1x2048xf32>
    %5 = vector.broadcast %2 : f32 to vector<1x2048xf32>
    %6 = arith.minimumf %4, %5 : vector<1x2048xf32>
    %c0_2 = arith.constant 0 : index
    %c0_3 = arith.constant 0 : index
    %7 = vector.load %arg3[%c0_2, %c0_3] : memref<1x2048xf32, #tpu.memory_space<vmem>>, vector<1x2048xf32>
    tpu.vector_store %arg3[%c0_2, %c0_3], %6 {strides = array<i32>} : memref<1x2048xf32, #tpu.memory_space<vmem>>, vector<1x2048xf32>,
    return
  }
  func.func @transform_0(%arg0: i32) -> i32 {
    %c0_i32 = arith.constant 0 : i32
    %c0_i32_0 = arith.constant 0 : i32
    return %c0_i32 : i32
  }
  func.func @transform_1(%arg0: i32) -> (i32, i32) {
    %c0_i32 = arith.constant 0 : i32
    %c0_i32_0 = arith.constant 0 : i32
    return %arg0, %c0_i32 : i32, i32
  }
  func.func @transform_2(%arg0: i32) -> (i32, i32) {
    %c0_i32 = arith.constant 0 : i32
    %c0_i32_0 = arith.constant 0 : i32
    return %arg0, %c0_i32 : i32, i32
  }
}

</mosaic_0001>

<llo_original>
// kernel: tpu_custom_call.1
$region0: #{tpu_custom_call.1}
  #allocation0 [shape = 'u32[]', space=smem, size = 0x4, offset = 0x4, fixed_abs, tag = 'smem constant byte address 0x4 - core index']
  #allocation1 [shape = 'u32[144,128]{1,0:T(1,128)}', space=vmem, size = 0x12000, scoped, tag = 'internal scratch']
  %s0 = inlined_call_operand.hbm [shape: f32[2], index: 0, kind: input, shape index: {}]
  %s1 = inlined_call_operand.hbm [shape: f32[1,2048], index: 1, kind: input, shape index: {}]
  %s2 = inlined_call_operand.hbm [shape: f32[1,2048], index: 2, kind: output, shape index: {}]
  %s3 = sld [smem:[#allocation0]]
  $region26: #{tpu_custom_call.1} parent=0
    _
  %s5 = ssub.s32 1, %s3
  %s6 = scalar_select 0, %s5, %s3
  $region1: #{tpu_custom_call.1} parent=0
    #allocation2 [shape = 'u8[512]{0}', space=smem, size = 0x200, scoped, tag = 'input window, operand 0, single buffered']
    #allocation3 [shape = 's32[1]{0}', space=sflag, size = 0x4, scoped, tag = 'scoped memory for tpu_custom_call.1']
    #allocation4 [shape = 's32[1]{0}', space=sflag, size = 0x4, scoped, tag = 'scoped memory for tpu_custom_call.1']
    #allocation5 [shape = 's32[1]{0}', space=sflag, size = 0x4, scoped, tag = 'scoped memory for tpu_custom_call.1']
    #allocation6 [shape = 'u8[8192]{0}', space=vmem, size = 0x2000, scoped, tag = 'input window, operand 1, single buffered']
    #allocation7 [shape = 'u8[8192]{0}', space=vmem, size = 0x2000, scoped, tag = 'output window, operand 0, single buffered']
    %7 = vsyncpa [#allocation5], 0
    %8 = vsyncpa [#allocation3], 0
    %9 = vsyncpa [#allocation4], 0
    // Predicated region
    $region2: #{tpu_custom_call.1} parent=1 // pred_check
      _
    $region3: #{tpu_custom_call.1} parent=1 // pred_check_branch
      %11 = sbr.rel (0) target = $region5
    $region4: #{tpu_custom_call.1} parent=1 // pred_region
      %s13 = ssub.s32 16, 16
      %14 = vsyncadd [#allocation5], %s13
      %17 = dma.hbm_to_smem %s0, 16, [#allocation2], [#allocation5]
    $region5: #{tpu_custom_call.1} parent=1 // pred_fallthru
      _
    // Predicated region
    $region6: #{tpu_custom_call.1} parent=1 // pred_check
      _
    $region7: #{tpu_custom_call.1} parent=1 // pred_check_branch
      %19 = sbr.rel (0) target = $region9
    $region8: #{tpu_custom_call.1} parent=1 // pred_region
      %s21 = ssub.s32 256, 256
      %22 = vsyncadd [#allocation3], %s21
      %s24 = sshll.u32 [#allocation6], 4
      %s25 = int_to_ptr.vmem [resolvable:$true] %s24
      %27 = dma.hbm_to_vmem [thread:$0]  %s1, 256, %s25, [#allocation3]
    $region9: #{tpu_custom_call.1} parent=1 // pred_fallthru
      _
    // Predicated region
    $region10: #{tpu_custom_call.1} parent=1 // pred_check
      _
    $region11: #{tpu_custom_call.1} parent=1 // pred_check_branch
      %29 = sbr.rel (0) target = $region13
    $region12: #{tpu_custom_call.1} parent=1 // pred_region
      %30 = dma.done [#allocation5], 16
    $region13: #{tpu_custom_call.1} parent=1 // pred_fallthru
      _
    // Predicated region
    $region14: #{tpu_custom_call.1} parent=1 // pred_check
      _
    $region15: #{tpu_custom_call.1} parent=1 // pred_check_branch
      %32 = sbr.rel (0) target = $region17
    $region16: #{tpu_custom_call.1} parent=1 // pred_region
      %33 = dma.done [#allocation3], 256
    $region17: #{tpu_custom_call.1} parent=1 // pred_fallthru
      _
    %34 = sfence
    %v35 = vld [vmem:[#allocation6] sm:$0xff]
    %v36 = vld [vmem:[#allocation6 + $0x8] sm:$0xff]
    %s37 = sld [smem:[#allocation2]]
    %s38 = sld [smem:[#allocation2 + $0x1]]
    %v39 = vstv %s37
    %v40 = vmax.f32 %v35, %v39
    %v41 = vmax.f32 %v36, %v39
    %v42 = vstv %s38
    %v43 = vmin.f32 %v40, %v42
    %v44 = vmin.f32 %v41, %v42
    %45 = vst [vmem:[#allocation7] sm:$0xff] %v43
    %46 = vst [vmem:[#allocation7 + $0x8] sm:$0xff] %v44
    // Predicated region
    $region18: #{tpu_custom_call.1} parent=1 // pred_check
      _
    $region19: #{tpu_custom_call.1} parent=1 // pred_check_branch
      %48 = sbr.rel (0) target = $region21
    $region20: #{tpu_custom_call.1} parent=1 // pred_region
      %s50 = ssub.s32 256, 256
      %51 = vsyncadd [#allocation4], %s50
      %s53 = sshll.u32 [#allocation7], 4
      %s54 = int_to_ptr.vmem [resolvable:$true] %s53
      %56 = dma.vmem_to_hbm [thread:$0]  %s54, 256, %s2, [#allocation4]
    $region21: #{tpu_custom_call.1} parent=1 // pred_fallthru
      _
    // Predicated region
    $region22: #{tpu_custom_call.1} parent=1 // pred_check
      _
    $region23: #{tpu_custom_call.1} parent=1 // pred_check_branch
      %58 = sbr.rel (0) target = $region25
    $region24: #{tpu_custom_call.1} parent=1 // pred_region
      %59 = dma.done [#allocation4], 256
    $region25: #{tpu_custom_call.1} parent=1 // pred_fallthru
      _
    %60 = vsyncpa [#allocation3], 1
    %61 = vsyncpa [#allocation4], 1
    %62 = vsyncpa [#allocation5], 1

</llo_original>
